<compile_context>
chip_gen: v5e
topology: v5e:2x2
jax: 0.10.0
libtpu: 0.0.40
codegen_flags: <defaults>
</compile_context>

<pallas_src>
import functools
import math

import numpy as np
import jax
import jax.numpy as jnp
from jax.experimental import pallas as pl
from jax.experimental.pallas import tpu as pltpu

SELU_ALPHA = 1.6732632423543772848170429916717
SELU_SCALE = 1.0507009873554804934193349852946
BIG_NEG = -1000000.0
LANE = 128                       # lane-dense padding target for every feature axis
VMEM_LIMIT = 32 * 1024 * 1024    # safe on v5e / v6e / v7x


def _round_up(x, m):
    return ((x + m - 1) // m) * m


def _selu(x):
    return SELU_SCALE * jnp.where(x > 0, x, SELU_ALPHA * (jnp.exp(x) - 1.0))


# ============================================================================
# Pallas kernels
# ============================================================================
@functools.lru_cache(maxsize=None)
def _make_ffn_kernel(n_layers, final_act):
    """Fused stack of Linear(bias=False) + SELU (FeedForwardNetwork)."""
    def kernel(*refs):
        x_ref = refs[0]
        w_refs = refs[1:1 + n_layers]
        out_ref = refs[1 + n_layers]
        h = x_ref[...]
        for i in range(n_layers):
            h = jnp.dot(h.astype(jnp.bfloat16), w_refs[i][...],
                        preferred_element_type=jnp.float32)
            if i < n_layers - 1:
                h = _selu(h)
        if final_act == "tanh":
            h = jnp.tanh(h)
        elif final_act == "sigmoid":
            h = jax.nn.sigmoid(h)
        out_ref[...] = h.astype(out_ref.dtype)
    return kernel


def _ffn_pallas(x, weights, final_act="none", out_dtype=jnp.float32, tile=1024):
    """Row-tiled FeedForwardNetwork. Feature axes are assumed pre-padded to 128
    on the weight side; the input's feature axis is zero-padded here."""
    rows = x.shape[0]
    in_w = weights[0].shape[0]
    out_w = weights[-1].shape[1]
    t = min(tile, _round_up(max(rows, 1), 8))
    rows_pad = _round_up(rows, t)
    x_p = jnp.pad(x, ((0, rows_pad - rows), (0, in_w - x.shape[1])))
    kernel = _make_ffn_kernel(len(weights), final_act)
    out = pl.pallas_call(
        kernel,
        out_shape=jax.ShapeDtypeStruct((rows_pad, out_w), out_dtype),
        grid=(rows_pad // t,),
        in_specs=([pl.BlockSpec((t, in_w), lambda i: (i, 0))]
                  + [pl.BlockSpec(w.shape, lambda i: (0, 0)) for w in weights]),
        out_specs=pl.BlockSpec((t, out_w), lambda i: (i, 0)),
        compiler_params=pltpu.CompilerParams(
            dimension_semantics=("parallel",),
            vmem_limit_bytes=VMEM_LIMIT),
    )(x_p, *weights)
    return out[:rows]


@functools.lru_cache(maxsize=None)
def _make_propagate_kernel(n_slots, n_emb, n_att):
    """Fused per-message-pass kernel: emb_msg_nn + att_msg_nn on every slot,
    masked softmax over slots, attention-weighted message sum, GRUCell(h=0)."""
    def kernel(*refs):
        cat_ref, mka_ref = refs[0], refs[1]
        emb_w = refs[2:2 + n_emb]
        att_w = refs[2 + n_emb:2 + n_emb + n_att]
        wiz_ref = refs[2 + n_emb + n_att]
        win_ref = refs[3 + n_emb + n_att]
        out_ref = refs[4 + n_emb + n_att]

        embs, engs = [], []
        for s in range(n_slots):                     # slot-major: (tile, 128) per slot
            x = cat_ref[s]
            h = x
            for li, w in enumerate(emb_w):
                h = jnp.dot(h.astype(jnp.bfloat16), w[...],
                            preferred_element_type=jnp.float32)
                if li < n_emb - 1:
                    h = _selu(h)
            embs.append(h)
            g = x
            for li, w in enumerate(att_w):
                g = jnp.dot(g.astype(jnp.bfloat16), w[...],
                            preferred_element_type=jnp.float32)
                if li < n_att - 1:
                    g = _selu(g)
            engs.append(g + mka_ref[s])              # additive -1e6 mask (slot 0 unmasked)

        # numerically stable softmax over slots, accumulated on the VPU
        m = engs[0]
        for s in range(1, n_slots):
            m = jnp.maximum(m, engs[s])
        den = jnp.zeros_like(m)
        msg = jnp.zeros_like(m)
        for s in range(n_slots):
            p = jnp.exp(engs[s] - m)
            den = den + p
            msg = msg + p * embs[s]
        msg = msg * pl.reciprocal(den, approx=True)

        # GRUCell(bias=False) with hx = 0:  h' = (1 - sigmoid(W_iz m)) * tanh(W_in m)
        z = jax.nn.sigmoid(jnp.dot(msg.astype(jnp.bfloat16), wiz_ref[...],
                                   preferred_element_type=jnp.float32))
        n = jnp.tanh(jnp.dot(msg.astype(jnp.bfloat16), win_ref[...],
                             preferred_element_type=jnp.float32))
        out_ref[...] = ((1.0 - z) * n).astype(out_ref.dtype)
    return kernel


def _propagate_pallas(cat_in, mask_add, emb_ws, att_ws, wiz, win, tile):
    n_slots, ne_pad, ep = cat_in.shape
    kernel = _make_propagate_kernel(n_slots, len(emb_ws), len(att_ws))
    w_all = list(emb_ws) + list(att_ws) + [wiz, win]
    return pl.pallas_call(
        kernel,
        out_shape=jax.ShapeDtypeStruct((ne_pad, ep), jnp.bfloat16),
        grid=(ne_pad // tile,),
        in_specs=([pl.BlockSpec((n_slots, tile, ep), lambda i: (0, i, 0)),
                   pl.BlockSpec((n_slots, tile, 1), lambda i: (0, i, 0))]
                  + [pl.BlockSpec(w.shape, lambda i: (0, 0)) for w in w_all]),
        out_specs=pl.BlockSpec((tile, ep), lambda i: (i, 0)),
        compiler_params=pltpu.CompilerParams(
            dimension_semantics=("parallel",),
            vmem_limit_bytes=VMEM_LIMIT),
    )(cat_in, mask_add, *w_all)


@functools.lru_cache(maxsize=None)
def _make_gather_kernel(tile_n, n_att, n_emb):
    """Fused GraphGather readout: att FFN + emb FFN + masked sigmoid, summed
    over nodes via a reduction grid axis with a VMEM accumulator."""
    def kernel(*refs):
        gs_ref, mka_ref = refs[0], refs[1]
        att_w = refs[2:2 + n_att]
        emb_w = refs[2 + n_att:2 + n_att + n_emb]
        out_ref = refs[2 + n_att + n_emb]
        acc_ref = refs[3 + n_att + n_emb]

        jn = pl.program_id(1)

        @pl.when(jn == 0)
        def _():
            acc_ref[...] = jnp.zeros_like(acc_ref)

        contrib = jnp.zeros_like(acc_ref)
        for t in range(tile_n):                      # node-major: (tile_b, 128) per node
            x = gs_ref[t]
            a = x
            for li, w in enumerate(att_w):
                a = jnp.dot(a.astype(jnp.bfloat16), w[...],
                            preferred_element_type=jnp.float32)
                if li < n_att - 1:
                    a = _selu(a)
            att = jax.nn.sigmoid(a - mka_ref[t])     # subtract 1e6 on masked nodes
            e = x
            for li, w in enumerate(emb_w):
                e = jnp.dot(e.astype(jnp.bfloat16), w[...],
                            preferred_element_type=jnp.float32)
                if li < n_emb - 1:
                    e = _selu(e)
            contrib = contrib + att * e
        acc_ref[...] = acc_ref[...] + contrib

        @pl.when(jn == pl.num_programs(1) - 1)
        def _():
            out_ref[...] = acc_ref[...]
    return kernel


def _gather_pallas(gs_nm, mka_nm, att_ws, emb_ws, tile_b, tile_n):
    n_pad, b_pad, ep = gs_nm.shape
    gp = att_ws[-1].shape[1]
    kernel = _make_gather_kernel(tile_n, len(att_ws), len(emb_ws))
    w_all = list(att_ws) + list(emb_ws)
    return pl.pallas_call(
        kernel,
        out_shape=jax.ShapeDtypeStruct((b_pad, gp), jnp.float32),
        grid=(b_pad // tile_b, n_pad // tile_n),
        in_specs=([pl.BlockSpec((tile_n, tile_b, ep), lambda ib, jn: (jn, ib, 0)),
                   pl.BlockSpec((tile_n, tile_b, 1), lambda ib, jn: (jn, ib, 0))]
                  + [pl.BlockSpec(w.shape, lambda ib, jn: (0, 0)) for w in w_all]),
        out_specs=pl.BlockSpec((tile_b, gp), lambda ib, jn: (ib, 0)),
        scratch_shapes=[pltpu.VMEM((tile_b, gp), jnp.float32)],
        compiler_params=pltpu.CompilerParams(
            dimension_semantics=("parallel", "arbitrary"),
            vmem_limit_bytes=VMEM_LIMIT),
    )(gs_nm, mka_nm, *w_all)


# ============================================================================
# Jitted forward stages (pure jnp glue + pallas_call)
# ============================================================================
@functools.partial(jax.jit, static_argnames=("ne_pad", "tile"))
def _preprocess(nodes, edges, eb, en, enhb, weights, *, ne_pad, tile):
    cat = jnp.concatenate([nodes[eb, en], nodes[eb, enhb], edges[eb, en, enhb]],
                          axis=1)                               # (Ne, 84)
    cat = jnp.pad(cat, ((0, ne_pad - cat.shape[0]), (0, 0)))
    # tanh(embedding_nn(cat)), stored bf16 (it is re-read every message pass)
    return _ffn_pallas(cat, list(weights), final_act="tanh",
                       out_dtype=jnp.bfloat16, tile=tile)       # (ne_pad, 128)


@functools.partial(jax.jit, static_argnames=("n_slots", "tile"))
def _message_pass(edge_batch_edges, edge_memories, ieb, ige, igeb, mask_add,
                  emb_ws, att_ws, wiz, win, *, n_slots, tile):
    n_deg = n_slots - 1
    ne_pad, ep = edge_memories.shape
    # scatter edge memories into their incoming-edge slots (slot-major layout)
    ing = jnp.zeros((n_deg, ne_pad, ep), edge_memories.dtype)
    ing = ing.at[ige, igeb].set(edge_memories[ieb])
    cat_in = jnp.concatenate([edge_batch_edges[None], ing], axis=0)  # (S, ne_pad, 128)
    return _propagate_pallas(cat_in, mask_add, list(emb_ws), list(att_ws),
                             wiz, win, tile)


@functools.partial(jax.jit, static_argnames=("n_edges", "batch", "n_nodes",
                                             "b_pad", "n_pad", "tile_b",
                                             "tile_n", "modeltype"))
def _readout(edge_memories, eb, en, node_mask_add, att_ws, emb_ws, out_ws, *,
             n_edges, batch, n_nodes, b_pad, n_pad, tile_b, tile_n, modeltype):
    ep = edge_memories.shape[1]
    # segment-sum of edge memories onto their source node (== node_sets.sum(2))
    graph_sets = jnp.zeros((batch, n_nodes, ep), jnp.float32).at[eb, en].add(
        edge_memories[:n_edges].astype(jnp.float32))
    gs_nm = jnp.transpose(graph_sets, (1, 0, 2))                 # node-major (N, B, 128)
    gs_nm = jnp.pad(gs_nm, ((0, n_pad - n_nodes), (0, b_pad - batch), (0, 0)))
    graph_emb = _gather_pallas(gs_nm, node_mask_add, list(att_ws), list(emb_ws),
                               tile_b, tile_n)                   # (b_pad, 128)
    final_act = "sigmoid" if modeltype == "Classification" else "none"
    out = _ffn_pallas(graph_emb, list(out_ws), final_act=final_act,
                      out_dtype=jnp.float32)
    return out[:batch, :1]


def emn_forward(prepared_params, graph, nodes, edges, message_passes=6,
                modeltype="Classification"):
    p, g = prepared_params, graph
    edge_batch_edges = _preprocess(nodes, edges, g["eb"], g["en"], g["enhb"],
                                   tuple(p["embedding_nn"]),
                                   ne_pad=g["ne_pad"], tile=g["tile_e"])
    edge_memories = jnp.zeros((g["ne_pad"], LANE), jnp.bfloat16)
    for _ in range(message_passes):
        edge_memories = _message_pass(
            edge_batch_edges, edge_memories,
            g["ieb"], g["ige"], g["igeb"], g["edge_mask_add"],
            tuple(p["emb_msg_nn"]), tuple(p["att_msg_nn"]),
            p["gru_w_iz_t"], p["gru_w_in_t"],
            n_slots=g["n_slots"], tile=g["tile_e"])
    return _readout(edge_memories, g["eb"], g["en"], g["node_mask_add"],
                    tuple(p["gather_att_nn"]), tuple(p["gather_emb_nn"]),
                    tuple(p["out_nn"]),
                    n_edges=g["n_edges"], batch=g["batch"], n_nodes=g["n_nodes"],
                    b_pad=g["b_pad"], n_pad=g["n_pad"],
                    tile_b=g["tile_b"], tile_n=g["tile_n"], modeltype=modeltype)


# ============================================================================
# Parameters (deterministic, matches FeedForwardNetwork/GRUCell init)
# ============================================================================
def make_ffn_weights(key, in_features, hidden_sizes, out_features):
    sizes = [in_features] + list(hidden_sizes) + [out_features]
    ws = []
    for i in range(len(sizes) - 1):
        key, sub = jax.random.split(key)
        std = math.sqrt(1.0 / sizes[i])      # nn.init.normal_(std=sqrt(1/in))
        # PyTorch Linear weight is (out, in), x @ W.T; store transposed (in, out).
        ws.append(jax.random.normal(sub, (sizes[i], sizes[i + 1]), jnp.float32) * std)
    return ws, key


def make_emn_params(seed=0):
    E, FE = 40, 4
    key = jax.random.PRNGKey(seed)
    p = {}
    p["embedding_nn"], key = make_ffn_weights(key, 2 * E + FE, [120] * 3, E)
    p["emb_msg_nn"], key = make_ffn_weights(key, E, [80] * 3, E)
    p["att_msg_nn"], key = make_ffn_weights(key, E, [80] * 3, E)
    p["gather_att_nn"], key = make_ffn_weights(key, 2 * E, [80] * 3, 100)
    p["gather_emb_nn"], key = make_ffn_weights(key, E, [80] * 3, 100)
    p["out_nn"], key = make_ffn_weights(key, 100, [60, 60], 1)
    # GRUCell(E, E, bias=False): weight_ih is (3E, E) with [r; z; n] row blocks.
    key, sub = jax.random.split(key)
    k = 1.0 / math.sqrt(E)
    w_ih = jax.random.uniform(sub, (3 * E, E), jnp.float32, -k, k)
    p["gru_w_iz_t"] = jnp.transpose(w_ih[E:2 * E])
    p["gru_w_in_t"] = jnp.transpose(w_ih[2 * E:])
    return p


def _pad128(w):
    r, c = w.shape
    return jnp.pad(w, ((0, _round_up(r, LANE) - r), (0, _round_up(c, LANE) - c)))


def prepare_params(p):
    """Zero-pad every weight to 128-lane multiples and cast to bf16; fold the
    duplicated concat([graph_sets, graph_sets]) into the first gather-att layer
    (x@[Wt;Wb] with identical halves == x@(Wt+Wb))."""
    q = {}
    for name in ["embedding_nn", "emb_msg_nn", "att_msg_nn",
                 "gather_emb_nn", "out_nn"]:
        q[name] = [_pad128(w).astype(jnp.bfloat16) for w in p[name]]
    ga = p["gather_att_nn"]
    half = ga[0].shape[0] // 2
    w0_folded = ga[0][:half] + ga[0][half:]
    q["gather_att_nn"] = ([_pad128(w0_folded).astype(jnp.bfloat16)]
                          + [_pad128(w).astype(jnp.bfloat16) for w in ga[1:]])
    q["gru_w_iz_t"] = _pad128(p["gru_w_iz_t"]).astype(jnp.bfloat16)
    q["gru_w_in_t"] = _pad128(p["gru_w_in_t"]).astype(jnp.bfloat16)
    return q


# ============================================================================
# One-time graph index precomputation (off the per-forward hot path)
# ============================================================================
# TODO(synk): the nonzero / ragged-degree bookkeeping has data-dependent shapes
# and stays as host-side numpy, executed once per graph batch (not per forward).
def precompute_graph_indices(adjacency, tile_edges=512):
    adj = np.asarray(jax.device_get(adjacency)).astype(np.float32)
    B, N, _ = adj.shape
    eb, en, enhb = np.nonzero(adj)                    # lexicographic, like torch.nonzero
    n_edges = int(eb.shape[0])
    adj_eidx = adj.astype(np.int64)
    adj_eidx[eb, en, enhb] = np.arange(n_edges) + 1

    ingoing_eb = np.concatenate(
        [row[row != 0] - 1 for row in adj_eidx[eb, enhb, :]]).astype(np.int64)
    edge_degrees = adj[eb, enhb, :].sum(-1).astype(np.int64)
    ingoing_igeb = np.concatenate(
        [np.full(d, i, np.int64) for i, d in enumerate(edge_degrees)])
    ingoing_ige = np.concatenate([np.arange(d, dtype=np.int64) for d in edge_degrees])
    max_node_degree = int(adj.sum(-1).max())

    ingoing_nhb = enhb[ingoing_eb]
    recv_n = en[ingoing_igeb]
    keep = recv_n != ingoing_nhb                      # drop the reverse edge
    ingoing_eb = ingoing_eb[keep]
    ingoing_ige = ingoing_ige[keep]
    ingoing_igeb = ingoing_igeb[keep]

    n_deg = max_node_degree
    n_slots = n_deg + 1
    tile_e = min(tile_edges, _round_up(n_edges, 8))
    ne_pad = _round_up(n_edges, tile_e)

    # slot-major additive attention mask: slot 0 (the edge itself) is unmasked
    mask = np.zeros((n_deg, ne_pad), np.float32)
    mask[ingoing_ige, ingoing_igeb] = 1.0
    slot0 = np.zeros((1, ne_pad), np.float32)
    slot0[0, :n_edges] = 1.0
    mask_ext = np.concatenate([slot0, mask], axis=0)             # (S, ne_pad)
    edge_mask_add = ((1.0 - mask_ext) * BIG_NEG)[:, :, None]     # (S, ne_pad, 1)

    # node-major gather mask (+1e6 subtracted where the node is absent/padded)
    node_mask = adj.sum(-1) != 0                                 # (B, N)
    tile_b = min(128, _round_up(B, 8))
    b_pad = _round_up(B, tile_b)
    tile_n = min(16, _round_up(N, 8))
    n_pad = _round_up(N, tile_n)
    node_mask_add = np.full((n_pad, b_pad), 1.0e6, np.float32)
    node_mask_add[:N, :B] = np.where(node_mask.T, 0.0, 1.0e6)
    node_mask_add = node_mask_add[:, :, None]

    return dict(
        eb=jnp.asarray(eb, jnp.int32),
        en=jnp.asarray(en, jnp.int32),
        enhb=jnp.asarray(enhb, jnp.int32),
        ieb=jnp.asarray(ingoing_eb, jnp.int32),
        ige=jnp.asarray(ingoing_ige, jnp.int32),
        igeb=jnp.asarray(ingoing_igeb, jnp.int32),
        edge_mask_add=jnp.asarray(edge_mask_add),
        node_mask_add=jnp.asarray(node_mask_add),
        n_edges=n_edges, ne_pad=ne_pad, tile_e=tile_e, n_slots=n_slots,
        batch=B, n_nodes=N, b_pad=b_pad, n_pad=n_pad,
        tile_b=tile_b, tile_n=tile_n)


# ============================================================================
if __name__ == "__main__":
    B, N = 2, 6
    NODE_F, EDGE_F = 40, 4

    key = jax.random.PRNGKey(0)
    key, k_adj, k_nodes, k_edges = jax.random.split(key, 4)

    # symmetric adjacency, zero diagonal, at least one edge per graph
    upper = (jax.random.uniform(k_adj, (B, N, N)) < 0.4).astype(jnp.float32)
    adj = jnp.triu(upper, k=1)
    adj = adj + jnp.swapaxes(adj, 1, 2)
    adj = adj.at[:, 0, 1].set(1.0).at[:, 1, 0].set(1.0)

    nodes = jax.random.normal(k_nodes, (B, N, NODE_F), jnp.float32)
    edges = jax.random.normal(k_edges, (B, N, N, EDGE_F), jnp.float32)

    params = make_emn_params(seed=0)
    prepared = prepare_params(params)
    graph = precompute_graph_indices(adj)            # host glue, once per graph batch

    out = emn_forward(prepared, graph, nodes, edges, message_passes=6,
                      modeltype="Classification")
    out = jax.block_until_ready(out)
    assert out.shape == (B, 1)
    assert bool(jnp.all(jnp.isfinite(out)))
    print("KERNEL_OK")
</pallas_src>

<mosaic_0001>
module attributes {stable_mosaic.version = 11 : i64} {
  func.func @kernel(%arg0: i32, %arg1: memref<32x128xf32, #tpu.memory_space<vmem>>, %arg2: memref<128x128xbf16, #tpu.memory_space<vmem>>, %arg3: memref<128x128xbf16, #tpu.memory_space<vmem>>, %arg4: memref<128x128xbf16, #tpu.memory_space<vmem>>, %arg5: memref<128x128xbf16, #tpu.memory_space<vmem>>, %arg6: memref<32x128xbf16, #tpu.memory_space<vmem>>) attributes {dimension_semantics = [#tpu.dimension_semantics<parallel>], iteration_bounds = array<i64: 1>, scalar_prefetch = 0 : i64, scratch_operands = 0 : i64, tpu.core_type = #tpu.core_type<tc>, window_params = [{transform_indices = @transform_0, window_bounds = array<i64: 32, 128>}, {pipeline_mode = #tpu.pipeline_mode<synchronous>, transform_indices = @transform_1, window_bounds = array<i64: 128, 128>}, {pipeline_mode = #tpu.pipeline_mode<synchronous>, transform_indices = @transform_2, window_bounds = array<i64: 128, 128>}, {pipeline_mode = #tpu.pipeline_mode<synchronous>, transform_indices = @transform_3, window_bounds = array<i64: 128, 128>}, {pipeline_mode = #tpu.pipeline_mode<synchronous>, transform_indices = @transform_4, window_bounds = array<i64: 128, 128>}, {transform_indices = @transform_5, window_bounds = array<i64: 32, 128>}]} {
    %c0 = arith.constant 0 : index
    %c0_0 = arith.constant 0 : index
    %0 = vector.load %arg1[%c0, %c0_0] : memref<32x128xf32, #tpu.memory_space<vmem>>, vector<32x128xf32>
    %1 = arith.truncf %0 : vector<32x128xf32> to vector<32x128xbf16>
    %c0_1 = arith.constant 0 : index
    %c0_2 = arith.constant 0 : index
    %2 = vector.load %arg2[%c0_1, %c0_2] : memref<128x128xbf16, #tpu.memory_space<vmem>>, vector<128x128xbf16>
    %cst = arith.constant dense<0.000000e+00> : vector<32x128xf32>
    %3 = tpu.matmul %1, %2, %cst {dimension_numbers = #tpu.dot_dimension_numbers<[1], [0], [0], [1], [0, 0, 1, 1], [], []>} : vector<32x128xbf16>, vector<128x128xbf16>, vector<32x128xf32> -> vector<32x128xf32>
    %cst_3 = arith.constant 0.000000e+00 : f32
    %4 = vector.broadcast %cst_3 : f32 to vector<32x128xf32>
    %5 = arith.cmpf ogt, %3, %4 : vector<32x128xf32>
    %6 = math.exp %3 : vector<32x128xf32>
    %cst_4 = arith.constant 1.000000e+00 : f32
    %7 = vector.broadcast %cst_4 : f32 to vector<32x128xf32>
    %8 = arith.subf %6, %7 : vector<32x128xf32>
    %cst_5 = arith.constant 1.67326319 : f32
    %9 = vector.broadcast %cst_5 : f32 to vector<32x128xf32>
    %10 = arith.mulf %9, %8 : vector<32x128xf32>
    %11 = arith.select %5, %3, %10 : vector<32x128xi1>, vector<32x128xf32>
    %cst_6 = arith.constant 1.05070102 : f32
    %12 = vector.broadcast %cst_6 : f32 to vector<32x128xf32>
    %13 = arith.mulf %12, %11 : vector<32x128xf32>
    %14 = arith.truncf %13 : vector<32x128xf32> to vector<32x128xbf16>
    %c0_7 = arith.constant 0 : index
    %c0_8 = arith.constant 0 : index
    %15 = vector.load %arg3[%c0_7, %c0_8] : memref<128x128xbf16, #tpu.memory_space<vmem>>, vector<128x128xbf16>
    %cst_9 = arith.constant dense<0.000000e+00> : vector<32x128xf32>
    %16 = tpu.matmul %14, %15, %cst_9 {dimension_numbers = #tpu.dot_dimension_numbers<[1], [0], [0], [1], [0, 0, 1, 1], [], []>} : vector<32x128xbf16>, vector<128x128xbf16>, vector<32x128xf32> -> vector<32x128xf32>
    %cst_10 = arith.constant 0.000000e+00 : f32
    %17 = vector.broadcast %cst_10 : f32 to vector<32x128xf32>
    %18 = arith.cmpf ogt, %16, %17 : vector<32x128xf32>
    %19 = math.exp %16 : vector<32x128xf32>
    %cst_11 = arith.constant 1.000000e+00 : f32
    %20 = vector.broadcast %cst_11 : f32 to vector<32x128xf32>
    %21 = arith.subf %19, %20 : vector<32x128xf32>
    %cst_12 = arith.constant 1.67326319 : f32
    %22 = vector.broadcast %cst_12 : f32 to vector<32x128xf32>
    %23 = arith.mulf %22, %21 : vector<32x128xf32>
    %24 = arith.select %18, %16, %23 : vector<32x128xi1>, vector<32x128xf32>
    %cst_13 = arith.constant 1.05070102 : f32
    %25 = vector.broadcast %cst_13 : f32 to vector<32x128xf32>
    %26 = arith.mulf %25, %24 : vector<32x128xf32>
    %27 = arith.truncf %26 : vector<32x128xf32> to vector<32x128xbf16>
    %c0_14 = arith.constant 0 : index
    %c0_15 = arith.constant 0 : index
    %28 = vector.load %arg4[%c0_14, %c0_15] : memref<128x128xbf16, #tpu.memory_space<vmem>>, vector<128x128xbf16>
    %cst_16 = arith.constant dense<0.000000e+00> : vector<32x128xf32>
    %29 = tpu.matmul %27, %28, %cst_16 {dimension_numbers = #tpu.dot_dimension_numbers<[1], [0], [0], [1], [0, 0, 1, 1], [], []>} : vector<32x128xbf16>, vector<128x128xbf16>, vector<32x128xf32> -> vector<32x128xf32>
    %cst_17 = arith.constant 0.000000e+00 : f32
    %30 = vector.broadcast %cst_17 : f32 to vector<32x128xf32>
    %31 = arith.cmpf ogt, %29, %30 : vector<32x128xf32>
    %32 = math.exp %29 : vector<32x128xf32>
    %cst_18 = arith.constant 1.000000e+00 : f32
    %33 = vector.broadcast %cst_18 : f32 to vector<32x128xf32>
    %34 = arith.subf %32, %33 : vector<32x128xf32>
    %cst_19 = arith.constant 1.67326319 : f32
    %35 = vector.broadcast %cst_19 : f32 to vector<32x128xf32>
    %36 = arith.mulf %35, %34 : vector<32x128xf32>
    %37 = arith.select %31, %29, %36 : vector<32x128xi1>, vector<32x128xf32>
    %cst_20 = arith.constant 1.05070102 : f32
    %38 = vector.broadcast %cst_20 : f32 to vector<32x128xf32>
    %39 = arith.mulf %38, %37 : vector<32x128xf32>
    %40 = arith.truncf %39 : vector<32x128xf32> to vector<32x128xbf16>
    %c0_21 = arith.constant 0 : index
    %c0_22 = arith.constant 0 : index
    %41 = vector.load %arg5[%c0_21, %c0_22] : memref<128x128xbf16, #tpu.memory_space<vmem>>, vector<128x128xbf16>
    %cst_23 = arith.constant dense<0.000000e+00> : vector<32x128xf32>
    %42 = tpu.matmul %40, %41, %cst_23 {dimension_numbers = #tpu.dot_dimension_numbers<[1], [0], [0], [1], [0, 0, 1, 1], [], []>} : vector<32x128xbf16>, vector<128x128xbf16>, vector<32x128xf32> -> vector<32x128xf32>
    %43 = math.tanh %42 : vector<32x128xf32>
    %44 = arith.truncf %43 : vector<32x128xf32> to vector<32x128xbf16>
    %c0_24 = arith.constant 0 : index
    %c0_25 = arith.constant 0 : index
    %45 = vector.load %arg6[%c0_24, %c0_25] : memref<32x128xbf16, #tpu.memory_space<vmem>>, vector<32x128xbf16>
    tpu.vector_store %arg6[%c0_24, %c0_25], %44 {strides = array<i32>} : memref<32x128xbf16, #tpu.memory_space<vmem>>, vector<32x128xbf16>,
    return
  }
  func.func @transform_0(%arg0: i32) -> (i32, i32) {
    %c0_i32 = arith.constant 0 : i32
    %c0_i32_0 = arith.constant 0 : i32
    return %arg0, %c0_i32 : i32, i32
  }
  func.func @transform_1(%arg0: i32) -> (i32, i32) {
    %c0_i32 = arith.constant 0 : i32
    %c0_i32_0 = arith.constant 0 : i32
    %c0_i32_1 = arith.constant 0 : i32
    return %c0_i32, %c0_i32_0 : i32, i32
  }
  func.func @transform_2(%arg0: i32) -> (i32, i32) {
    %c0_i32 = arith.constant 0 : i32
    %c0_i32_0 = arith.constant 0 : i32
    %c0_i32_1 = arith.constant 0 : i32
    return %c0_i32, %c0_i32_0 : i32, i32
  }
  func.func @transform_3(%arg0: i32) -> (i32, i32) {
    %c0_i32 = arith.constant 0 : i32
    %c0_i32_0 = arith.constant 0 : i32
    %c0_i32_1 = arith.constant 0 : i32
    return %c0_i32, %c0_i32_0 : i32, i32
  }
  func.func @transform_4(%arg0: i32) -> (i32, i32) {
    %c0_i32 = arith.constant 0 : i32
    %c0_i32_0 = arith.constant 0 : i32
    %c0_i32_1 = arith.constant 0 : i32
    return %c0_i32, %c0_i32_0 : i32, i32
  }
  func.func @transform_5(%arg0: i32) -> (i32, i32) {
    %c0_i32 = arith.constant 0 : i32
    %c0_i32_0 = arith.constant 0 : i32
    return %arg0, %c0_i32 : i32, i32
  }
}

</mosaic_0001>

<llo_original>
// kernel: _preprocess.1
$region0: #{_preprocess.1}
  #allocation0 [shape = 'u32[]', space=smem, size = 0x4, offset = 0x4, fixed_abs, tag = 'smem constant byte address 0x4 - core index']
  #allocation1 [shape = 'u32[72,128]{1,0:T(1,128)}', space=vmem, size = 0x9000, scoped, tag = 'internal scratch']
  %s0 = inlined_call_operand.vmem [shape: f32[32,128], index: 0, kind: input, shape index: {}]
  %s1 = inlined_call_operand.vmem [shape: bf16[128,128], index: 1, kind: input, shape index: {}]
  %s2 = inlined_call_operand.vmem [shape: bf16[128,128], index: 2, kind: input, shape index: {}]
  %s3 = inlined_call_operand.vmem [shape: bf16[128,128], index: 3, kind: input, shape index: {}]
  %s4 = inlined_call_operand.vmem [shape: bf16[128,128], index: 4, kind: input, shape index: {}]
  %s5 = inlined_call_operand.hbm [shape: bf16[32,128], index: 5, kind: output, shape index: {}]
  %s6 = sld [smem:[#allocation0]]
  $region30: #{_preprocess.1} parent=0
    _
  %s8 = ssub.s32 1, %s6
  %s9 = scalar_select 0, %s8, %s6
  $region1: #{_preprocess.1} parent=0
    #allocation2 [shape = 'u8[8192]{0}', space=vmem, size = 0x2000, scoped, tag = 'output window, operand 0, single buffered']
    #allocation3 [shape = 's32[1]{0}', space=sflag, size = 0x4, scoped, tag = 'scoped memory for _preprocess.1']
    %10 = vsyncpa [#allocation3], 0
    // Predicated region
    $region2: #{_preprocess.1} parent=1 // pred_check
      _
    $region3: #{_preprocess.1} parent=1 // pred_check_branch
      %12 = sbr.rel (0) target = $region5
    $region4: #{_preprocess.1} parent=1 // pred_region
      _
    $region5: #{_preprocess.1} parent=1 // pred_fallthru
      _
    // Predicated region
    $region6: #{_preprocess.1} parent=1 // pred_check
      _
    $region7: #{_preprocess.1} parent=1 // pred_check_branch
      %14 = sbr.rel (0) target = $region9
    $region8: #{_preprocess.1} parent=1 // pred_region
      _
    $region9: #{_preprocess.1} parent=1 // pred_fallthru
      _
    // Predicated region
    $region10: #{_preprocess.1} parent=1 // pred_check
      _
    $region11: #{_preprocess.1} parent=1 // pred_check_branch
      %16 = sbr.rel (0) target = $region13
    $region12: #{_preprocess.1} parent=1 // pred_region
      _
    $region13: #{_preprocess.1} parent=1 // pred_fallthru
      _
    // Predicated region
    $region14: #{_preprocess.1} parent=1 // pred_check
      _
    $region15: #{_preprocess.1} parent=1 // pred_check_branch
      %18 = sbr.rel (0) target = $region17
    $region16: #{_preprocess.1} parent=1 // pred_region
      _
    $region17: #{_preprocess.1} parent=1 // pred_fallthru
      _
    // Predicated region
    $region18: #{_preprocess.1} parent=1 // pred_check
      _
    $region19: #{_preprocess.1} parent=1 // pred_check_branch
      %20 = sbr.rel (0) target = $region21
    $region20: #{_preprocess.1} parent=1 // pred_region
      _
    $region21: #{_preprocess.1} parent=1 // pred_fallthru
      _
    %v21 = vld [vmem:[%s0] sm:$0xff]
    %v22 = vld [vmem:[%s0 + $0x8] sm:$0xff]
    %v23 = vld [vmem:[%s0 + $0x10] sm:$0xff]
    %v24 = vld [vmem:[%s0 + $0x18] sm:$0xff]
    %v25 = vpack.c.bf16 %v22, %v21
    %v26 = vpack.c.bf16 %v24, %v23
    %v27 = vld [vmem:[%s1] sm:$0xf]
    %v28 = vld [vmem:[%s1 + $0x4] sm:$0xf]
    %v29 = vld [vmem:[%s1 + $0x8] sm:$0xf]
    %v30 = vld [vmem:[%s1 + $0xc] sm:$0xf]
    %v31 = vld [vmem:[%s1 + $0x10] sm:$0xf]
    %v32 = vld [vmem:[%s1 + $0x14] sm:$0xf]
    %v33 = vld [vmem:[%s1 + $0x18] sm:$0xf]
    %v34 = vld [vmem:[%s1 + $0x1c] sm:$0xf]
    %v35 = vld [vmem:[%s1 + $0x20] sm:$0xf]
    %v36 = vld [vmem:[%s1 + $0x24] sm:$0xf]
    %v37 = vld [vmem:[%s1 + $0x28] sm:$0xf]
    %v38 = vld [vmem:[%s1 + $0x2c] sm:$0xf]
    %v39 = vld [vmem:[%s1 + $0x30] sm:$0xf]
    %v40 = vld [vmem:[%s1 + $0x34] sm:$0xf]
    %v41 = vld [vmem:[%s1 + $0x38] sm:$0xf]
    %v42 = vld [vmem:[%s1 + $0x3c] sm:$0xf]
    %v59 = vunpack.c.l.b16 %v27
    %v60 = vunpack.c.l.b16 %v28
    %v61 = vunpack.c.l.b16 %v29
    %v62 = vunpack.c.l.b16 %v30
    %v63 = vunpack.c.l.b16 %v31
    %v64 = vunpack.c.l.b16 %v32
    %v65 = vunpack.c.l.b16 %v33
    %v66 = vunpack.c.l.b16 %v34
    %v67 = vunpack.c.l.b16 %v35
    %v68 = vunpack.c.l.b16 %v36
    %v69 = vunpack.c.l.b16 %v37
    %v70 = vunpack.c.l.b16 %v38
    %v71 = vunpack.c.l.b16 %v39
    %v72 = vunpack.c.l.b16 %v40
    %v73 = vunpack.c.l.b16 %v41
    %v74 = vunpack.c.l.b16 %v42
    %v75 = vpack.c.b16 %v60, %v59
    %v76 = vpack.c.b16 %v62, %v61
    %v77 = vpack.c.b16 %v64, %v63
    %v78 = vpack.c.b16 %v66, %v65
    %v79 = vpack.c.b16 %v68, %v67
    %v80 = vpack.c.b16 %v70, %v69
    %v81 = vpack.c.b16 %v72, %v71
    %v82 = vpack.c.b16 %v74, %v73
    %91 = vmatpush.bf16.msra.mxu0 %v82
    %92 = vmatpush.bf16.msra.mxu0 %v81
    %93 = vmatpush.bf16.msra.mxu0 %v80
    %94 = vmatpush.bf16.msra.mxu0 %v79
    %95 = vmatpush.bf16.msra.mxu0 %v78
    %96 = vmatpush.bf16.msra.mxu0 %v77
    %97 = vmatpush.bf16.msra.mxu0 %v76
    %98 = vmatpush.bf16.msra.mxu0 %v75
    %99 = vmatmul.bf16.gmra.mxu0 %v25
    %v100 = vpop.f32.mrf.mxu0
    %v101 = vadd.f32 0.0, %v100
    %v102 = vpop.f32.mrf.mxu0
    %v103 = vadd.f32 0.0, %v102
    %104 = vmatmul.bf16.gmra.mxu0 %v26
    %v105 = vpop.f32.mrf.mxu0
    %v106 = vadd.f32 0.0, %v105
    %v107 = vpop.f32.mrf.mxu0
    %v108 = vadd.f32 0.0, %v107
    %109 = vdwg.mxu0
    %vm110 = vcmp.gt.f32.partialorder %v101, 0.0
    %vm111 = vcmp.gt.f32.partialorder %v103, 0.0
    %vm112 = vcmp.gt.f32.partialorder %v106, 0.0
    %vm113 = vcmp.gt.f32.partialorder %v108, 0.0
    %v114 = vmul.f32 %v101, 1.442695
    %v115 = vpow.pop %v114
    %v116 = vmul.f32 %v103, 1.442695
    %v117 = vpow.pop %v116
    %v118 = vmul.f32 %v106, 1.442695
    %v119 = vpow.pop %v118
    %v120 = vmul.f32 %v108, 1.442695
    %v121 = vpow.pop %v120
    %v122 = vsub.f32 %v115, 1.0
    %v123 = vsub.f32 %v117, 1.0
    %v124 = vsub.f32 %v119, 1.0
    %v125 = vsub.f32 %v121, 1.0
    %v126 = vmul.f32 %v122, 1.6732632
    %v127 = vmul.f32 %v123, 1.6732632
    %v128 = vmul.f32 %v124, 1.6732632
    %v129 = vmul.f32 %v125, 1.6732632
    %v130 = vsel %vm110, %v101, %v126
    %v131 = vsel %vm111, %v103, %v127
    %v132 = vsel %vm112, %v106, %v128
    %v133 = vsel %vm113, %v108, %v129
    %v134 = vmul.f32 %v130, 1.050701
    %v135 = vmul.f32 %v131, 1.050701
    %v136 = vmul.f32 %v132, 1.050701
    %v137 = vmul.f32 %v133, 1.050701
    %v138 = vpack.c.bf16 %v135, %v134
    %v139 = vpack.c.bf16 %v137, %v136
    %v140 = vld [vmem:[%s2] sm:$0xf]
    %v141 = vld [vmem:[%s2 + $0x4] sm:$0xf]
    %v142 = vld [vmem:[%s2 + $0x8] sm:$0xf]
    %v143 = vld [vmem:[%s2 + $0xc] sm:$0xf]
    %v144 = vld [vmem:[%s2 + $0x10] sm:$0xf]
    %v145 = vld [vmem:[%s2 + $0x14] sm:$0xf]
    %v146 = vld [vmem:[%s2 + $0x18] sm:$0xf]
    %v147 = vld [vmem:[%s2 + $0x1c] sm:$0xf]
    %v148 = vld [vmem:[%s2 + $0x20] sm:$0xf]
    %v149 = vld [vmem:[%s2 + $0x24] sm:$0xf]
    %v150 = vld [vmem:[%s2 + $0x28] sm:$0xf]
    %v151 = vld [vmem:[%s2 + $0x2c] sm:$0xf]
    %v152 = vld [vmem:[%s2 + $0x30] sm:$0xf]
    %v153 = vld [vmem:[%s2 + $0x34] sm:$0xf]
    %v154 = vld [vmem:[%s2 + $0x38] sm:$0xf]
    %v155 = vld [vmem:[%s2 + $0x3c] sm:$0xf]
    %v172 = vunpack.c.l.b16 %v140
    %v173 = vunpack.c.l.b16 %v141
    %v174 = vunpack.c.l.b16 %v142
    %v175 = vunpack.c.l.b16 %v143
    %v176 = vunpack.c.l.b16 %v144
    %v177 = vunpack.c.l.b16 %v145
    %v178 = vunpack.c.l.b16 %v146
    %v179 = vunpack.c.l.b16 %v147
    %v180 = vunpack.c.l.b16 %v148
    %v181 = vunpack.c.l.b16 %v149
    %v182 = vunpack.c.l.b16 %v150
    %v183 = vunpack.c.l.b16 %v151
    %v184 = vunpack.c.l.b16 %v152
    %v185 = vunpack.c.l.b16 %v153
    %v186 = vunpack.c.l.b16 %v154
    %v187 = vunpack.c.l.b16 %v155
    %v188 = vpack.c.b16 %v173, %v172
    %v189 = vpack.c.b16 %v175, %v174
    %v190 = vpack.c.b16 %v177, %v176
    %v191 = vpack.c.b16 %v179, %v178
    %v192 = vpack.c.b16 %v181, %v180
    %v193 = vpack.c.b16 %v183, %v182
    %v194 = vpack.c.b16 %v185, %v184
    %v195 = vpack.c.b16 %v187, %v186
    %204 = vmatpush.bf16.msra.mxu0 %v195
    %205 = vmatpush.bf16.msra.mxu0 %v194
    %206 = vmatpush.bf16.msra.mxu0 %v193
    %207 = vmatpush.bf16.msra.mxu0 %v192
    %208 = vmatpush.bf16.msra.mxu0 %v191
    %209 = vmatpush.bf16.msra.mxu0 %v190
    %210 = vmatpush.bf16.msra.mxu0 %v189
    %211 = vmatpush.bf16.msra.mxu0 %v188
    %212 = vmatmul.bf16.gmra.mxu0 %v138
    %v213 = vpop.f32.mrf.mxu0
    %v214 = vadd.f32 0.0, %v213
    %v215 = vpop.f32.mrf.mxu0
    %v216 = vadd.f32 0.0, %v215
    %217 = vmatmul.bf16.gmra.mxu0 %v139
    %v218 = vpop.f32.mrf.mxu0
    %v219 = vadd.f32 0.0, %v218
    %v220 = vpop.f32.mrf.mxu0
    %v221 = vadd.f32 0.0, %v220
    %222 = vdwg.mxu0
    %vm223 = vcmp.gt.f32.partialorder %v214, 0.0
    %vm224 = vcmp.gt.f32.partialorder %v216, 0.0
    %vm225 = vcmp.gt.f32.partialorder %v219, 0.0
    %vm226 = vcmp.gt.f32.partialorder %v221, 0.0
    %v227 = vmul.f32 %v214, 1.442695
    %v228 = vpow.pop %v227
    %v229 = vmul.f32 %v216, 1.442695
    %v230 = vpow.pop %v229
    %v231 = vmul.f32 %v219, 1.442695
    %v232 = vpow.pop %v231
    %v233 = vmul.f32 %v221, 1.442695
    %v234 = vpow.pop %v233
    %v235 = vsub.f32 %v228, 1.0
    %v236 = vsub.f32 %v230, 1.0
    %v237 = vsub.f32 %v232, 1.0
    %v238 = vsub.f32 %v234, 1.0
    %v239 = vmul.f32 %v235, 1.6732632
    %v240 = vmul.f32 %v236, 1.6732632
    %v241 = vmul.f32 %v237, 1.6732632
    %v242 = vmul.f32 %v238, 1.6732632
    %v243 = vsel %vm223, %v214, %v239
    %v244 = vsel %vm224, %v216, %v240
    %v245 = vsel %vm225, %v219, %v241
    %v246 = vsel %vm226, %v221, %v242
    %v247 = vmul.f32 %v243, 1.050701
    %v248 = vmul.f32 %v244, 1.050701
    %v249 = vmul.f32 %v245, 1.050701
    %v250 = vmul.f32 %v246, 1.050701
    %v251 = vpack.c.bf16 %v248, %v247
    %v252 = vpack.c.bf16 %v250, %v249
    %v253 = vld [vmem:[%s3] sm:$0xf]
    %v254 = vld [vmem:[%s3 + $0x4] sm:$0xf]
    %v255 = vld [vmem:[%s3 + $0x8] sm:$0xf]
    %v256 = vld [vmem:[%s3 + $0xc] sm:$0xf]
    %v257 = vld [vmem:[%s3 + $0x10] sm:$0xf]
    %v258 = vld [vmem:[%s3 + $0x14] sm:$0xf]
    %v259 = vld [vmem:[%s3 + $0x18] sm:$0xf]
    %v260 = vld [vmem:[%s3 + $0x1c] sm:$0xf]
    %v261 = vld [vmem:[%s3 + $0x20] sm:$0xf]
    %v262 = vld [vmem:[%s3 + $0x24] sm:$0xf]
    %v263 = vld [vmem:[%s3 + $0x28] sm:$0xf]
    %v264 = vld [vmem:[%s3 + $0x2c] sm:$0xf]
    %v265 = vld [vmem:[%s3 + $0x30] sm:$0xf]
    %v266 = vld [vmem:[%s3 + $0x34] sm:$0xf]
    %v267 = vld [vmem:[%s3 + $0x38] sm:$0xf]
    %v268 = vld [vmem:[%s3 + $0x3c] sm:$0xf]
    %v285 = vunpack.c.l.b16 %v253
    %v286 = vunpack.c.l.b16 %v254
    %v287 = vunpack.c.l.b16 %v255
    %v288 = vunpack.c.l.b16 %v256
    %v289 = vunpack.c.l.b16 %v257
    %v290 = vunpack.c.l.b16 %v258
    %v291 = vunpack.c.l.b16 %v259
    %v292 = vunpack.c.l.b16 %v260
    %v293 = vunpack.c.l.b16 %v261
    %v294 = vunpack.c.l.b16 %v262
    %v295 = vunpack.c.l.b16 %v263
    %v296 = vunpack.c.l.b16 %v264
    %v297 = vunpack.c.l.b16 %v265
    %v298 = vunpack.c.l.b16 %v266
    %v299 = vunpack.c.l.b16 %v267
    %v300 = vunpack.c.l.b16 %v268
    %v301 = vpack.c.b16 %v286, %v285
    %v302 = vpack.c.b16 %v288, %v287
    %v303 = vpack.c.b16 %v290, %v289
    %v304 = vpack.c.b16 %v292, %v291
    %v305 = vpack.c.b16 %v294, %v293
    %v306 = vpack.c.b16 %v296, %v295
    %v307 = vpack.c.b16 %v298, %v297
    %v308 = vpack.c.b16 %v300, %v299
    %317 = vmatpush.bf16.msra.mxu0 %v308
    %318 = vmatpush.bf16.msra.mxu0 %v307
    %319 = vmatpush.bf16.msra.mxu0 %v306
    %320 = vmatpush.bf16.msra.mxu0 %v305
    %321 = vmatpush.bf16.msra.mxu0 %v304
    %322 = vmatpush.bf16.msra.mxu0 %v303
    %323 = vmatpush.bf16.msra.mxu0 %v302
    %324 = vmatpush.bf16.msra.mxu0 %v301
    %325 = vmatmul.bf16.gmra.mxu0 %v251
    %v326 = vpop.f32.mrf.mxu0
    %v327 = vadd.f32 0.0, %v326
    %v328 = vpop.f32.mrf.mxu0
    %v329 = vadd.f32 0.0, %v328
    %330 = vmatmul.bf16.gmra.mxu0 %v252
    %v331 = vpop.f32.mrf.mxu0
    %v332 = vadd.f32 0.0, %v331
    %v333 = vpop.f32.mrf.mxu0
    %v334 = vadd.f32 0.0, %v333
    %335 = vdwg.mxu0
    %vm336 = vcmp.gt.f32.partialorder %v327, 0.0
    %vm337 = vcmp.gt.f32.partialorder %v329, 0.0
    %vm338 = vcmp.gt.f32.partialorder %v332, 0.0
    %vm339 = vcmp.gt.f32.partialorder %v334, 0.0
    %v340 = vmul.f32 %v327, 1.442695
    %v341 = vpow.pop %v340
    %v342 = vmul.f32 %v329, 1.442695
    %v343 = vpow.pop %v342
    %v344 = vmul.f32 %v332, 1.442695
    %v345 = vpow.pop %v344
    %v346 = vmul.f32 %v334, 1.442695
    %v347 = vpow.pop %v346
    %v348 = vsub.f32 %v341, 1.0
    %v349 = vsub.f32 %v343, 1.0
    %v350 = vsub.f32 %v345, 1.0
    %v351 = vsub.f32 %v347, 1.0
    %v352 = vmul.f32 %v348, 1.6732632
    %v353 = vmul.f32 %v349, 1.6732632
    %v354 = vmul.f32 %v350, 1.6732632
    %v355 = vmul.f32 %v351, 1.6732632
    %v356 = vsel %vm336, %v327, %v352
    %v357 = vsel %vm337, %v329, %v353
    %v358 = vsel %vm338, %v332, %v354
    %v359 = vsel %vm339, %v334, %v355
    %v360 = vmul.f32 %v356, 1.050701
    %v361 = vmul.f32 %v357, 1.050701
    %v362 = vmul.f32 %v358, 1.050701
    %v363 = vmul.f32 %v359, 1.050701
    %v364 = vpack.c.bf16 %v361, %v360
    %v365 = vpack.c.bf16 %v363, %v362
    %v366 = vld [vmem:[%s4] sm:$0xf]
    %v367 = vld [vmem:[%s4 + $0x4] sm:$0xf]
    %v368 = vld [vmem:[%s4 + $0x8] sm:$0xf]
    %v369 = vld [vmem:[%s4 + $0xc] sm:$0xf]
    %v370 = vld [vmem:[%s4 + $0x10] sm:$0xf]
    %v371 = vld [vmem:[%s4 + $0x14] sm:$0xf]
    %v372 = vld [vmem:[%s4 + $0x18] sm:$0xf]
    %v373 = vld [vmem:[%s4 + $0x1c] sm:$0xf]
    %v374 = vld [vmem:[%s4 + $0x20] sm:$0xf]
    %v375 = vld [vmem:[%s4 + $0x24] sm:$0xf]
    %v376 = vld [vmem:[%s4 + $0x28] sm:$0xf]
    %v377 = vld [vmem:[%s4 + $0x2c] sm:$0xf]
    %v378 = vld [vmem:[%s4 + $0x30] sm:$0xf]
    %v379 = vld [vmem:[%s4 + $0x34] sm:$0xf]
    %v380 = vld [vmem:[%s4 + $0x38] sm:$0xf]
    %v381 = vld [vmem:[%s4 + $0x3c] sm:$0xf]
    %v398 = vunpack.c.l.b16 %v366
    %v399 = vunpack.c.l.b16 %v367
    %v400 = vunpack.c.l.b16 %v368
    %v401 = vunpack.c.l.b16 %v369
    %v402 = vunpack.c.l.b16 %v370
    %v403 = vunpack.c.l.b16 %v371
    %v404 = vunpack.c.l.b16 %v372
    %v405 = vunpack.c.l.b16 %v373
    %v406 = vunpack.c.l.b16 %v374
    %v407 = vunpack.c.l.b16 %v375
    %v408 = vunpack.c.l.b16 %v376
    %v409 = vunpack.c.l.b16 %v377
    %v410 = vunpack.c.l.b16 %v378
    %v411 = vunpack.c.l.b16 %v379
    %v412 = vunpack.c.l.b16 %v380
    %v413 = vunpack.c.l.b16 %v381
    %v414 = vpack.c.b16 %v399, %v398
    %v415 = vpack.c.b16 %v401, %v400
    %v416 = vpack.c.b16 %v403, %v402
    %v417 = vpack.c.b16 %v405, %v404
    %v418 = vpack.c.b16 %v407, %v406
    %v419 = vpack.c.b16 %v409, %v408
    %v420 = vpack.c.b16 %v411, %v410
    %v421 = vpack.c.b16 %v413, %v412
    %430 = vmatpush.bf16.msra.mxu0 %v421
    %431 = vmatpush.bf16.msra.mxu0 %v420
    %432 = vmatpush.bf16.msra.mxu0 %v419
    %433 = vmatpush.bf16.msra.mxu0 %v418
    %434 = vmatpush.bf16.msra.mxu0 %v417
    %435 = vmatpush.bf16.msra.mxu0 %v416
    %436 = vmatpush.bf16.msra.mxu0 %v415
    %437 = vmatpush.bf16.msra.mxu0 %v414
    %438 = vmatmul.bf16.gmra.mxu0 %v364
    %v439 = vpop.f32.mrf.mxu0
    %v440 = vadd.f32 0.0, %v439
    %v441 = vpop.f32.mrf.mxu0
    %v442 = vadd.f32 0.0, %v441
    %443 = vmatmul.bf16.gmra.mxu0 %v365
    %v444 = vpop.f32.mrf.mxu0
    %v445 = vadd.f32 0.0, %v444
    %v446 = vpop.f32.mrf.mxu0
    %v447 = vadd.f32 0.0, %v446
    %448 = vdwg.mxu0
    %v449 = vtanh.pop %v440
    %v450 = vtanh.pop %v442
    %v451 = vtanh.pop %v445
    %v452 = vtanh.pop %v447
    %v453 = vpack.c.bf16 %v449, %v449
    %v454 = vpack.c.bf16 %v450, %v450
    %v455 = vpack.c.bf16 %v451, %v451
    %v456 = vpack.c.bf16 %v452, %v452
    %457 = vst [vmem:[#allocation2] sm:$0xf] %v453
    %458 = vst [vmem:[#allocation2 + $0x4] sm:$0xf] %v454
    %459 = vst [vmem:[#allocation2 + $0x8] sm:$0xf] %v455
    %460 = vst [vmem:[#allocation2 + $0xc] sm:$0xf] %v456
    // Predicated region
    $region22: #{_preprocess.1} parent=1 // pred_check
      _
    $region23: #{_preprocess.1} parent=1 // pred_check_branch
      %462 = sbr.rel (0) target = $region25
    $region24: #{_preprocess.1} parent=1 // pred_region
      %464 = vsyncadd [#allocation3], 0
      %s465 = sshll.u32 [#allocation2], 4
      %s466 = int_to_ptr.vmem [resolvable:$true] %s465
      %s467 = sshll.u32 %s5, 4
      %s468 = int_to_ptr.hbm [resolvable:$true] %s467
      %473 = dma.vmem_to_hbm [thread:$0]  %s466, 256, %s468, [#allocation3], 64, 64, 4
    $region25: #{_preprocess.1} parent=1 // pred_fallthru
      _
    // Predicated region
    $region26: #{_preprocess.1} parent=1 // pred_check
      _
    $region27: #{_preprocess.1} parent=1 // pred_check_branch
      %475 = sbr.rel (0) target = $region29
    $region28: #{_preprocess.1} parent=1 // pred_region
      %477 = dma.done [#allocation3], 256
    $region29: #{_preprocess.1} parent=1 // pred_fallthru
      _
    %478 = vsyncpa [#allocation3], 1

</llo_original>
